<compile_context>
chip_gen: v6e
topology: v6e:2x2x1
jax: 0.10.0
libtpu: 0.0.40
codegen_flags: <defaults>
</compile_context>

<pallas_src>
import jax
import jax.numpy as jnp
from jax import lax
from jax.experimental import pallas as pl
from jax.experimental.pallas import tpu as pltpu

_LANES = 128
_TARGET_STEP_BYTES = 8 << 20   # pred+mask bytes DMA'd per grid step (~4 MiB/input)
_CHUNK_ROWS = 512              # in-kernel compute tile (bounds vreg/VMEM temporaries)
_VMEM_LIMIT_BYTES = 32 << 20


def _round_up(x: int, m: int) -> int:
    return ((x + m - 1) // m) * m


def _row_granule(dtype) -> int:
    # Minimum sublane multiple for the packed dtype: f32 -> 8, bf16 -> 16, int8 -> 32.
    return {1: 32, 2: 16, 4: 8}.get(jnp.dtype(dtype).itemsize, 8)


_STREAM_DTYPES = (jnp.dtype(jnp.float32), jnp.dtype(jnp.bfloat16),
                  jnp.dtype(jnp.int8), jnp.dtype(jnp.uint8))


def _flatten_native(x: jax.Array) -> jax.Array:
    """Flatten (free bitcast); stream f32/bf16/int8/uint8 natively, bool as int8."""
    x = jnp.ravel(x)
    if x.dtype == jnp.bool_:
        return x.astype(jnp.int8)          # 1-byte stream instead of a 4-byte f32 copy
    if jnp.dtype(x.dtype) in _STREAM_DTYPES:
        return x
    return x.astype(jnp.float32)           # fp16 / fp64 / int32 / etc.


def _num_tensorcores() -> int:
    """TensorCores reachable behind one JAX device (megacore grid sharding)."""
    try:
        kind = jax.devices()[0].device_kind.lower()
    except Exception:
        return 1
    if "v7" in kind:
        return 2
    if ("v4" in kind or "v5p" in kind) and "lite" not in kind:
        return 2
    return 1                                # v2/v3 per-core devices, v5e, v6e, ...


def _make_dice_kernel(rows: int, block_rows: int, blocks_per_core: int,
                      chunk_rows: int):
    """Kernel over a (rows, 128) slab, grid = (num_cores, blocks_per_core)."""
    chunks_per_block = block_rows // chunk_rows
    sub = chunk_rows // 8

    def kernel(pred_ref, mask_ref, out_ref, pm_acc, ps_acc):
        c = pl.program_id(0)
        j = pl.program_id(1)

        @pl.when(j == 0)
        def _init():
            pm_acc[...] = jnp.zeros_like(pm_acc)
            ps_acc[...] = jnp.zeros_like(ps_acc)

        # First logical (unclamped) row of this step.  Overhang steps
        # (row0 >= rows) and the trailing partial block take the masked path;
        # their DMA source is clamped by the index_map so it stays in bounds.
        row0 = (c * blocks_per_core + j) * block_rows

        def load_chunk(i):
            r = pl.multiple_of(i * chunk_rows, chunk_rows)
            p = pred_ref[pl.ds(r, chunk_rows), :].astype(jnp.float32)
            m = mask_ref[pl.ds(r, chunk_rows), :].astype(jnp.float32)
            return p, m

        def accumulate(p, m):
            # Keep (8, 128) vreg-shaped sublane partials: no cross-sublane
            # reduce and no partial-vreg RMW on the hot path.
            pm = jnp.sum((p * m).reshape(sub, 8, _LANES), axis=0)
            ps = jnp.sum((p + m).reshape(sub, 8, _LANES), axis=0)
            pm_acc[...] += pm
            ps_acc[...] += ps

        @pl.when(row0 + block_rows <= rows)
        def _full_block():                   # hot path: no per-element mask
            def body(i, carry):
                p, m = load_chunk(i)
                accumulate(p, m)
                return carry
            lax.fori_loop(0, chunks_per_block, body, 0)

        @pl.when(row0 + block_rows > rows)
        def _partial_block():                # at most one block per core
            def body(i, carry):
                p, m = load_chunk(i)
                rid = row0 + i * chunk_rows + lax.broadcasted_iota(
                    jnp.int32, (chunk_rows, _LANES), 0)
                valid = rid < rows
                # Select-before-multiply so NaN/Inf garbage in padded /
                # clamped rows cannot poison the sums.
                accumulate(jnp.where(valid, p, 0.0), jnp.where(valid, m, 0.0))
                return carry
            lax.fori_loop(0, chunks_per_block, body, 0)

        @pl.when(j == blocks_per_core - 1)
        def _finalize():
            out_ref[0] = pm_acc[...]         # sum(pred * mask) sublane partials
            out_ref[1] = ps_acc[...]         # sum(pred) + sum(mask) sublane partials

    return kernel


def dice_loss(pred: jax.Array, mask: jax.Array) -> jax.Array:
    """Pallas equivalent of DiceLoss.forward(pred, mask) -> scalar f32."""
    p = _flatten_native(pred)
    m = _flatten_native(mask)
    n = p.shape[0]

    rows = n // _LANES
    n_bulk = rows * _LANES

    counter = jnp.float32(0.0)
    densum = jnp.float32(0.0)

    if rows > 0:
        granule = max(_row_granule(p.dtype), _row_granule(m.dtype))
        chunk_rows = _round_up(min(_CHUNK_ROWS, _round_up(rows, granule)), granule)

        # Byte-based block sizing: ~8 MiB of pred+mask per grid step, rounded
        # to a multiple of the compute chunk, clamped for small inputs.
        bytes_per_row = _LANES * (p.dtype.itemsize + m.dtype.itemsize)
        target_rows = max(_TARGET_STEP_BYTES // bytes_per_row, chunk_rows)
        block_rows = (target_rows // chunk_rows) * chunk_rows
        block_rows = min(block_rows, _round_up(rows, chunk_rows))

        total_blocks = pl.cdiv(rows, block_rows)
        num_cores = _num_tensorcores()
        blocks_per_core = pl.cdiv(total_blocks, num_cores)

        # Bitcast reshape (no HBM copy) whenever n % 128 == 0 (common case);
        # otherwise only the 128-aligned bulk is materialised once.
        p2 = p[:n_bulk].reshape(rows, _LANES)
        m2 = m[:n_bulk].reshape(rows, _LANES)

        def in_map(c, j):
            # Clamp so overhanging steps re-read the last valid block; their
            # contribution is zeroed by the in-kernel row mask.
            return (jnp.minimum(c * blocks_per_core + j, total_blocks - 1), 0)

        cost = pl.CostEstimate(
            flops=5 * n,
            transcendentals=0,
            bytes_accessed=n * (p.dtype.itemsize + m.dtype.itemsize)
            + num_cores * 2 * 8 * _LANES * 4,
        )

        parts = pl.pallas_call(
            _make_dice_kernel(rows, block_rows, blocks_per_core, chunk_rows),
            out_shape=jax.ShapeDtypeStruct((num_cores * 2, 8, _LANES), jnp.float32),
            grid_spec=pltpu.PrefetchScalarGridSpec(
                num_scalar_prefetch=0,
                grid=(num_cores, blocks_per_core),
                in_specs=[
                    pl.BlockSpec((block_rows, _LANES), in_map),
                    pl.BlockSpec((block_rows, _LANES), in_map),
                ],
                out_specs=pl.BlockSpec((2, 8, _LANES), lambda c, j: (c, 0, 0)),
                scratch_shapes=[
                    pltpu.VMEM((8, _LANES), jnp.float32),   # sum(p*m) partials
                    pltpu.VMEM((8, _LANES), jnp.float32),   # sum(p)+sum(m) partials
                ],
            ),
            compiler_params=pltpu.CompilerParams(
                dimension_semantics=("parallel", "arbitrary"),
                vmem_limit_bytes=_VMEM_LIMIT_BYTES,
            ),
            cost_estimate=cost,
        )(p2, m2)

        parts = parts.reshape(num_cores, 2, 8, _LANES)
        counter = jnp.sum(parts[:, 0])
        densum = jnp.sum(parts[:, 1])

    if n_bulk < n:
        # Lane tail (< 128 elements): trivial, do it in plain JAX.
        tp = p[n_bulk:].astype(jnp.float32)
        tm = m[n_bulk:].astype(jnp.float32)
        counter = counter + jnp.sum(tp * tm)
        densum = densum + jnp.sum(tp) + jnp.sum(tm)

    denum = densum + jnp.float32(1e-7)
    return 1.0 - 2.0 * counter / denum


def _dice_loss_ref(pred, mask):
    p = jnp.ravel(pred).astype(jnp.float32)
    m = jnp.ravel(mask).astype(jnp.float32)
    counter = jnp.sum(p * m)
    denum = jnp.sum(p) + jnp.sum(m) + 1e-7
    return 1.0 - 2.0 * counter / denum


if __name__ == "__main__":
    key = jax.random.PRNGKey(0)
    k1, k2, k3, k4 = jax.random.split(key, 4)

    # Primary check: f32 pred / f32 mask at a small segmentation-head shape (NCHW).
    pred = jax.nn.sigmoid(jax.random.normal(k1, (2, 4, 16, 16), jnp.float32))
    mask = (jax.random.uniform(k2, (2, 4, 16, 16)) > 0.5).astype(jnp.float32)
    out = jax.block_until_ready(jax.jit(dice_loss)(pred, mask))
    ref = jax.block_until_ready(_dice_loss_ref(pred, mask))
    assert jnp.allclose(out, ref, rtol=1e-5, atol=1e-6), (out, ref)

    # Secondary check: bf16 pred streamed natively + bool mask streamed as int8.
    pred2 = jax.nn.sigmoid(jax.random.normal(k3, (2, 4, 32, 32))).astype(jnp.bfloat16)
    mask2 = jax.random.uniform(k4, (2, 4, 32, 32)) > 0.5
    out2 = jax.block_until_ready(jax.jit(dice_loss)(pred2, mask2))
    ref2 = jax.block_until_ready(_dice_loss_ref(pred2, mask2))
    assert jnp.allclose(out2, ref2, rtol=1e-4, atol=1e-5), (out2, ref2)

    print("KERNEL_OK")
</pallas_src>

<mosaic_0001>
module attributes {stable_mosaic.version = 11 : i64} {
  func.func @kernel(%arg0: i32, %arg1: i32, %arg2: memref<16x128xf32, #tpu.memory_space<vmem>>, %arg3: memref<16x128xf32, #tpu.memory_space<vmem>>, %arg4: memref<2x8x128xf32, #tpu.memory_space<vmem>>, %arg5: memref<8x128xf32, #tpu.memory_space<vmem>>, %arg6: memref<8x128xf32, #tpu.memory_space<vmem>>) attributes {dimension_semantics = [#tpu.dimension_semantics<parallel>, #tpu.dimension_semantics<arbitrary>], iteration_bounds = array<i64: 1, 1>, scalar_prefetch = 0 : i64, scratch_operands = 2 : i64, tpu.core_type = #tpu.core_type<tc>, window_params = [{transform_indices = @transform_0, window_bounds = array<i64: 16, 128>}, {transform_indices = @transform_1, window_bounds = array<i64: 16, 128>}, {transform_indices = @transform_2, window_bounds = array<i64: 2, 8, 128>}]} {
    %c0_i32 = arith.constant 0 : i32
    %0 = arith.cmpi eq, %arg1, %c0_i32 : i32
    %1 = arith.extui %0 : i1 to i32
    %c0_i32_0 = arith.constant 0 : i32
    %2 = arith.cmpi ne, %1, %c0_i32_0 : i32
    scf.if %2 {
      %cst = arith.constant 0.000000e+00 : f32
      %17 = vector.broadcast %cst : f32 to vector<8x128xf32>
      %c0 = arith.constant 0 : index
      %c0_9 = arith.constant 0 : index
      %18 = vector.load %arg5[%c0, %c0_9] : memref<8x128xf32, #tpu.memory_space<vmem>>, vector<8x128xf32>
      tpu.vector_store %arg5[%c0, %c0_9], %17 {strides = array<i32>} : memref<8x128xf32, #tpu.memory_space<vmem>>, vector<8x128xf32>,
      %cst_10 = arith.constant 0.000000e+00 : f32
      %19 = vector.broadcast %cst_10 : f32 to vector<8x128xf32>
      %c0_11 = arith.constant 0 : index
      %c0_12 = arith.constant 0 : index
      %20 = vector.load %arg6[%c0_11, %c0_12] : memref<8x128xf32, #tpu.memory_space<vmem>>, vector<8x128xf32>
      tpu.vector_store %arg6[%c0_11, %c0_12], %19 {strides = array<i32>} : memref<8x128xf32, #tpu.memory_space<vmem>>, vector<8x128xf32>,
    } else {
    }
    %c1_i32 = arith.constant 1 : i32
    %3 = arith.muli %arg0, %c1_i32 : i32
    %4 = arith.addi %3, %arg1 : i32
    %c16_i32 = arith.constant 16 : i32
    %5 = arith.muli %4, %c16_i32 : i32
    %c16_i32_1 = arith.constant 16 : i32
    %6 = arith.addi %5, %c16_i32_1 : i32
    %c16_i32_2 = arith.constant 16 : i32
    %7 = arith.cmpi sle, %6, %c16_i32_2 : i32
    %8 = arith.extui %7 : i1 to i32
    %c0_i32_3 = arith.constant 0 : i32
    %9 = arith.cmpi ne, %8, %c0_i32_3 : i32
    scf.if %9 {
      %c0_i32_9 = arith.constant 0 : i32
      %c16_i32_10 = arith.constant 16 : i32
      %17 = arith.muli %c0_i32_9, %c16_i32_10 : i32
      %18 = tpu.assume_multiple %17, 16 : i32
      %19 = arith.index_cast %18 : i32 to index
      %c0 = arith.constant 0 : index
      %20 = vector.load %arg2[%19, %c0] : memref<16x128xf32, #tpu.memory_space<vmem>>, vector<16x128xf32>
      %21 = arith.index_cast %18 : i32 to index
      %c0_11 = arith.constant 0 : index
      %22 = vector.load %arg3[%21, %c0_11] : memref<16x128xf32, #tpu.memory_space<vmem>>, vector<16x128xf32>
      %23 = arith.mulf %20, %22 : vector<16x128xf32>
      %24 = vector.shape_cast %23 : vector<16x128xf32> to vector<2x8x128xf32>
      %cst = arith.constant dense<0.000000e+00> : vector<8x128xf32>
      %25 = vector.multi_reduction <add>, %24, %cst [0] : vector<2x8x128xf32> to vector<8x128xf32>
      %26 = arith.addf %20, %22 : vector<16x128xf32>
      %27 = vector.shape_cast %26 : vector<16x128xf32> to vector<2x8x128xf32>
      %cst_12 = arith.constant dense<0.000000e+00> : vector<8x128xf32>
      %28 = vector.multi_reduction <add>, %27, %cst_12 [0] : vector<2x8x128xf32> to vector<8x128xf32>
      %c0_13 = arith.constant 0 : index
      %c0_14 = arith.constant 0 : index
      %29 = vector.load %arg5[%c0_13, %c0_14] : memref<8x128xf32, #tpu.memory_space<vmem>>, vector<8x128xf32>
      %30 = arith.addf %29, %25 : vector<8x128xf32>
      %c0_15 = arith.constant 0 : index
      %c0_16 = arith.constant 0 : index
      %31 = vector.load %arg5[%c0_15, %c0_16] : memref<8x128xf32, #tpu.memory_space<vmem>>, vector<8x128xf32>
      tpu.vector_store %arg5[%c0_15, %c0_16], %30 {strides = array<i32>} : memref<8x128xf32, #tpu.memory_space<vmem>>, vector<8x128xf32>,
      %c0_17 = arith.constant 0 : index
      %c0_18 = arith.constant 0 : index
      %32 = vector.load %arg6[%c0_17, %c0_18] : memref<8x128xf32, #tpu.memory_space<vmem>>, vector<8x128xf32>
      %33 = arith.addf %32, %28 : vector<8x128xf32>
      %c0_19 = arith.constant 0 : index
      %c0_20 = arith.constant 0 : index
      %34 = vector.load %arg6[%c0_19, %c0_20] : memref<8x128xf32, #tpu.memory_space<vmem>>, vector<8x128xf32>
      tpu.vector_store %arg6[%c0_19, %c0_20], %33 {strides = array<i32>} : memref<8x128xf32, #tpu.memory_space<vmem>>, vector<8x128xf32>,
      %c1_i32_21 = arith.constant 1 : i32
    } else {
    }
    %c16_i32_4 = arith.constant 16 : i32
    %10 = arith.addi %5, %c16_i32_4 : i32
    %c16_i32_5 = arith.constant 16 : i32
    %11 = arith.cmpi sgt, %10, %c16_i32_5 : i32
    %12 = arith.extui %11 : i1 to i32
    %c0_i32_6 = arith.constant 0 : i32
    %13 = arith.cmpi ne, %12, %c0_i32_6 : i32
    scf.if %13 {
      %c0_i32_9 = arith.constant 0 : i32
      %c16_i32_10 = arith.constant 16 : i32
      %17 = arith.muli %c0_i32_9, %c16_i32_10 : i32
      %18 = tpu.assume_multiple %17, 16 : i32
      %19 = arith.index_cast %18 : i32 to index
      %c0 = arith.constant 0 : index
      %20 = vector.load %arg2[%19, %c0] : memref<16x128xf32, #tpu.memory_space<vmem>>, vector<16x128xf32>
      %21 = arith.index_cast %18 : i32 to index
      %c0_11 = arith.constant 0 : index
      %22 = vector.load %arg3[%21, %c0_11] : memref<16x128xf32, #tpu.memory_space<vmem>>, vector<16x128xf32>
      %c16_i32_12 = arith.constant 16 : i32
      %23 = arith.muli %c0_i32_9, %c16_i32_12 : i32
      %24 = arith.addi %5, %23 : i32
      %25 = tpu.iota {dimensions = array<i32: 0>} : vector<16x128xi32>
      %26 = vector.broadcast %24 : i32 to vector<16x128xi32>
      %27 = arith.addi %26, %25 : vector<16x128xi32>
      %c16_i32_13 = arith.constant 16 : i32
      %28 = vector.broadcast %c16_i32_13 : i32 to vector<16x128xi32>
      %29 = arith.cmpi slt, %27, %28 : vector<16x128xi32>
      %cst = arith.constant 0.000000e+00 : f32
      %30 = vector.broadcast %cst : f32 to vector<16x128xf32>
      %31 = arith.select %29, %20, %30 : vector<16x128xi1>, vector<16x128xf32>
      %cst_14 = arith.constant 0.000000e+00 : f32
      %32 = vector.broadcast %cst_14 : f32 to vector<16x128xf32>
      %33 = arith.select %29, %22, %32 : vector<16x128xi1>, vector<16x128xf32>
      %34 = arith.mulf %31, %33 : vector<16x128xf32>
      %35 = vector.shape_cast %34 : vector<16x128xf32> to vector<2x8x128xf32>
      %cst_15 = arith.constant dense<0.000000e+00> : vector<8x128xf32>
      %36 = vector.multi_reduction <add>, %35, %cst_15 [0] : vector<2x8x128xf32> to vector<8x128xf32>
      %37 = arith.addf %31, %33 : vector<16x128xf32>
      %38 = vector.shape_cast %37 : vector<16x128xf32> to vector<2x8x128xf32>
      %cst_16 = arith.constant dense<0.000000e+00> : vector<8x128xf32>
      %39 = vector.multi_reduction <add>, %38, %cst_16 [0] : vector<2x8x128xf32> to vector<8x128xf32>
      %c0_17 = arith.constant 0 : index
      %c0_18 = arith.constant 0 : index
      %40 = vector.load %arg5[%c0_17, %c0_18] : memref<8x128xf32, #tpu.memory_space<vmem>>, vector<8x128xf32>
      %41 = arith.addf %40, %36 : vector<8x128xf32>
      %c0_19 = arith.constant 0 : index
      %c0_20 = arith.constant 0 : index
      %42 = vector.load %arg5[%c0_19, %c0_20] : memref<8x128xf32, #tpu.memory_space<vmem>>, vector<8x128xf32>
      tpu.vector_store %arg5[%c0_19, %c0_20], %41 {strides = array<i32>} : memref<8x128xf32, #tpu.memory_space<vmem>>, vector<8x128xf32>,
      %c0_21 = arith.constant 0 : index
      %c0_22 = arith.constant 0 : index
      %43 = vector.load %arg6[%c0_21, %c0_22] : memref<8x128xf32, #tpu.memory_space<vmem>>, vector<8x128xf32>
      %44 = arith.addf %43, %39 : vector<8x128xf32>
      %c0_23 = arith.constant 0 : index
      %c0_24 = arith.constant 0 : index
      %45 = vector.load %arg6[%c0_23, %c0_24] : memref<8x128xf32, #tpu.memory_space<vmem>>, vector<8x128xf32>
      tpu.vector_store %arg6[%c0_23, %c0_24], %44 {strides = array<i32>} : memref<8x128xf32, #tpu.memory_space<vmem>>, vector<8x128xf32>,
      %c1_i32_25 = arith.constant 1 : i32
    } else {
    }
    %c0_i32_7 = arith.constant 0 : i32
    %14 = arith.cmpi eq, %arg1, %c0_i32_7 : i32
    %15 = arith.extui %14 : i1 to i32
    %c0_i32_8 = arith.constant 0 : i32
    %16 = arith.cmpi ne, %15, %c0_i32_8 : i32
    scf.if %16 {
      %c0 = arith.constant 0 : index
      %c0_9 = arith.constant 0 : index
      %17 = vector.load %arg5[%c0, %c0_9] : memref<8x128xf32, #tpu.memory_space<vmem>>, vector<8x128xf32>
      %c0_10 = arith.constant 0 : index
      %c0_11 = arith.constant 0 : index
      %c0_12 = arith.constant 0 : index
      %18 = vector.load %arg4[%c0_10, %c0_11, %c0_12] : memref<2x8x128xf32, #tpu.memory_space<vmem>>, vector<1x8x128xf32>
      %19 = vector.shape_cast %18 : vector<1x8x128xf32> to vector<8x128xf32>
      %20 = vector.shape_cast %17 : vector<8x128xf32> to vector<1x8x128xf32>
      tpu.vector_store %arg4[%c0_10, %c0_11, %c0_12], %20 {strides = array<i32>} : memref<2x8x128xf32, #tpu.memory_space<vmem>>, vector<1x8x128xf32>,
      %c0_13 = arith.constant 0 : index
      %c0_14 = arith.constant 0 : index
      %21 = vector.load %arg6[%c0_13, %c0_14] : memref<8x128xf32, #tpu.memory_space<vmem>>, vector<8x128xf32>
      %c1 = arith.constant 1 : index
      %c0_15 = arith.constant 0 : index
      %c0_16 = arith.constant 0 : index
      %22 = vector.load %arg4[%c1, %c0_15, %c0_16] : memref<2x8x128xf32, #tpu.memory_space<vmem>>, vector<1x8x128xf32>
      %23 = vector.shape_cast %22 : vector<1x8x128xf32> to vector<8x128xf32>
      %24 = vector.shape_cast %21 : vector<8x128xf32> to vector<1x8x128xf32>
      tpu.vector_store %arg4[%c1, %c0_15, %c0_16], %24 {strides = array<i32>} : memref<2x8x128xf32, #tpu.memory_space<vmem>>, vector<1x8x128xf32>,
    } else {
    }
    return
  }
  func.func @transform_0(%arg0: i32, %arg1: i32) -> (i32, i32) {
    %c1_i32 = arith.constant 1 : i32
    %0 = arith.muli %arg0, %c1_i32 : i32
    %1 = arith.addi %0, %arg1 : i32
    %c0_i32 = arith.constant 0 : i32
    %2 = arith.minsi %1, %c0_i32 : i32
    %c0_i32_0 = arith.constant 0 : i32
    %c0_i32_1 = arith.constant 0 : i32
    return %2, %c0_i32_0 : i32, i32
  }
  func.func @transform_1(%arg0: i32, %arg1: i32) -> (i32, i32) {
    %c1_i32 = arith.constant 1 : i32
    %0 = arith.muli %arg0, %c1_i32 : i32
    %1 = arith.addi %0, %arg1 : i32
    %c0_i32 = arith.constant 0 : i32
    %2 = arith.minsi %1, %c0_i32 : i32
    %c0_i32_0 = arith.constant 0 : i32
    %c0_i32_1 = arith.constant 0 : i32
    return %2, %c0_i32_0 : i32, i32
  }
  func.func @transform_2(%arg0: i32, %arg1: i32) -> (i32, i32, i32) {
    %c0_i32 = arith.constant 0 : i32
    %c0_i32_0 = arith.constant 0 : i32
    %c0_i32_1 = arith.constant 0 : i32
    return %arg0, %c0_i32, %c0_i32_0 : i32, i32, i32
  }
}

</mosaic_0001>

<llo_original>
// kernel: dice_loss.1
$region0: #{dice_loss.1}
  #allocation0 [shape = 'u32[]', space=smem, size = 0x4, offset = 0x4, fixed_abs, tag = 'smem constant byte address 0x4 - core index']
  #allocation1 [shape = 'u32[144,128]{1,0:T(1,128)}', space=vmem, size = 0x12000, scoped, tag = 'internal scratch']
  #allocation2 [shape = 'f32[8,128]{1,0:T(8,128)}', space=vmem, size = 0x1000, scoped, tag = 'scratch operand']
  #allocation3 [shape = 'f32[8,128]{1,0:T(8,128)}', space=vmem, size = 0x1000, scoped, tag = 'scratch operand']
  %s0 = inlined_call_operand.vmem [shape: f32[16,128], index: 0, kind: input, shape index: {}]
  %s1 = inlined_call_operand.vmem [shape: f32[16,128], index: 1, kind: input, shape index: {}]
  %s2 = inlined_call_operand.vmem [shape: f32[2,8,128], index: 2, kind: output, shape index: {}]
  %s3 = sld [smem:[#allocation0]]
  $region34: #{dice_loss.1} parent=0
    _
  %s5 = ssub.s32 1, %s3
  %s6 = scalar_select 0, %s5, %s3
  // Predicated region
  $region2: #{dice_loss.1} parent=0 // pred_check
    _
  $region3: #{dice_loss.1} parent=0 // pred_check_branch
    %8 = sbr.rel (0) target = $region5
  $region4: #{dice_loss.1} parent=0 // pred_region
    %s9 = sadd.s32 0, 0
    %p10 = scmp.lt.s32.totalorder %s9, 0
    %s11 = scalar_select %p10, %s9, 0
    %s12 = smul.u32 2, %s11
    %p13 = scmp.lt.s32.totalorder %s12, 1
    %s14 = scalar_select %p13, %s12, 1
    %s15 = smul.addr %s14, 8
    %s16 = scalar_lea.vmem %s0, %s15
    %s17 = sadd.s32 0, 0
    %p18 = scmp.lt.s32.totalorder %s17, 0
    %s19 = scalar_select %p18, %s17, 0
    %s20 = smul.u32 2, %s19
  $region5: #{dice_loss.1} parent=0 // pred_fallthru
    _
  // Predicated region
  $region6: #{dice_loss.1} parent=0 // pred_check
    _
  $region7: #{dice_loss.1} parent=0 // pred_check_branch
    %22 = sbr.rel (0) target = $region9
  $region8: #{dice_loss.1} parent=0 // pred_region
    %s23 = sadd.s32 0, 0
    %p24 = scmp.lt.s32.totalorder %s23, 0
    %s25 = scalar_select %p24, %s23, 0
    %s26 = smul.u32 2, %s25
    %p27 = scmp.lt.s32.totalorder %s26, 1
    %s28 = scalar_select %p27, %s26, 1
    %s29 = smul.addr %s28, 8
    %s30 = scalar_lea.vmem %s1, %s29
    %s31 = sadd.s32 0, 0
    %p32 = scmp.lt.s32.totalorder %s31, 0
    %s33 = scalar_select %p32, %s31, 0
    %s34 = smul.u32 2, %s33
  $region9: #{dice_loss.1} parent=0 // pred_fallthru
    _
  %s35 = sadd.s32 0, 0
  %p36 = scmp.lt.s32.totalorder %s35, 0
  %s37 = scalar_select %p36, %s35, 0
  %s38 = smul.u32 2, %s37
  %p39 = scmp.lt.s32.totalorder %s38, 1
  %s40 = scalar_select %p39, %s38, 1
  %s41 = smul.addr %s40, 8
  %s42 = scalar_lea.vmem %s0, %s41
  %s43 = sadd.s32 0, 0
  %p44 = scmp.lt.s32.totalorder %s43, 0
  %s45 = scalar_select %p44, %s43, 0
  %s46 = smul.u32 2, %s45
  %p47 = scmp.lt.s32.totalorder %s46, 1
  %s48 = scalar_select %p47, %s46, 1
  %s49 = smul.addr %s48, 8
  %s50 = scalar_lea.vmem %s1, %s49
  %s51 = sadd.s32 0, 0
  %p52 = scmp.lt.s32.totalorder %s51, 0
  %s53 = scalar_select %p52, %s51, 0
  %s54 = smul.u32 2, %s53
  %p55 = scmp.lt.s32.totalorder %s54, 1
  %s56 = scalar_select %p55, %s54, 1
  %s57 = smul.addr %s56, 8
  %s58 = scalar_lea.vmem %s0, %s57
  %s59 = sadd.s32 0, 0
  %p60 = scmp.lt.s32.totalorder %s59, 0
  %s61 = scalar_select %p60, %s59, 0
  %s62 = smul.u32 2, %s61
  %s63 = sadd.s32 0, 0
  %p64 = scmp.lt.s32.totalorder %s63, 0
  %s65 = scalar_select %p64, %s63, 0
  %s66 = smul.u32 2, %s65
  %p67 = scmp.lt.s32.totalorder %s66, 1
  %s68 = scalar_select %p67, %s66, 1
  %s69 = smul.addr %s68, 8
  %s70 = scalar_lea.vmem %s1, %s69
  %s71 = sadd.s32 0, 0
  %p72 = scmp.lt.s32.totalorder %s71, 0
  %s73 = scalar_select %p72, %s71, 0
  %s74 = smul.u32 2, %s73
  %p75 = scmp.eq.s32.totalorder 0, 0
  // Predicated region
  $region10: #{dice_loss.1} parent=0 // pred_check
    %p76 = pneg %p75
  $region11: #{dice_loss.1} parent=0 // pred_check_branch
    %78 = sbr.rel (%p76) target = $region13
  $region12: #{dice_loss.1} parent=0 // pred_region
    %79 = vst [vmem:[#allocation2] sm:$0xff] 0.0
    %80 = vst [vmem:[#allocation3] sm:$0xff] 0.0
  $region13: #{dice_loss.1} parent=0 // pred_fallthru
    _
  %s81 = sadd.s32 0, 0
  %s82 = smul.u32 %s81, 16
  %s83 = sadd.s32 %s82, 16
  %p84 = scmp.le.s32.totalorder %s83, 16
  // Predicated region
  $region14: #{dice_loss.1} parent=0 // pred_check
    %p85 = pneg %p84
  $region15: #{dice_loss.1} parent=0 // pred_check_branch
    %87 = sbr.rel (%p85) target = $region17
  $region16: #{dice_loss.1} parent=0 // pred_region
    %v88 = vld [vmem:[%s58] sm:$0xff]
    %v89 = vld [vmem:[%s58 + $0x8] sm:$0xff]
    %v90 = vld [vmem:[%s70] sm:$0xff]
    %v91 = vld [vmem:[%s70 + $0x8] sm:$0xff]
    %v92 = vmul.f32 %v88, %v90
    %v93 = vmul.f32 %v89, %v91
    %v94 = vadd.f32 %v92, %v93
    %v95 = vadd.f32 %v88, %v90
    %v96 = vadd.f32 %v89, %v91
    %v97 = vadd.f32 %v95, %v96
    %v98 = vld [vmem:[#allocation2] sm:$0xff]
    %v99 = vadd.f32 %v98, %v94
    %100 = vst [vmem:[#allocation2] sm:$0xff] %v99
    %v101 = vld [vmem:[#allocation3] sm:$0xff]
    %v102 = vadd.f32 %v101, %v97
    %103 = vst [vmem:[#allocation3] sm:$0xff] %v102
  $region17: #{dice_loss.1} parent=0 // pred_fallthru
    _
  %p104 = scmp.gt.s32.totalorder %s83, 16
  // Predicated region
  $region18: #{dice_loss.1} parent=0 // pred_check
    %p105 = pneg %p104
  $region19: #{dice_loss.1} parent=0 // pred_check_branch
    %107 = sbr.rel (%p105) target = $region21
  $region20: #{dice_loss.1} parent=0 // pred_region
    %v108 = vld [vmem:[%s58] sm:$0xff]
    %v109 = vld [vmem:[%s58 + $0x8] sm:$0xff]
    %v110 = vld [vmem:[%s70] sm:$0xff]
    %v111 = vld [vmem:[%s70 + $0x8] sm:$0xff]
    %v112 = vlaneseq
    %v113 = vshrl.u32 %v112, 7
    %v114 = vadd.s32 %v113, 8
    %v115 = vstv %s82
    %v116 = vadd.s32 %v115, %v113
    %v117 = vadd.s32 %v115, %v114
    %vm118 = vcmp.lt.s32.totalorder %v116, 16
    %vm119 = vcmp.lt.s32.totalorder %v117, 16
    %v120 = vsel %vm118, %v108, 0.0
    %v121 = vsel %vm119, %v109, 0.0
    %v122 = vsel %vm118, %v110, 0.0
    %v123 = vsel %vm119, %v111, 0.0
    %v124 = vmul.f32 %v120, %v122
    %v125 = vmul.f32 %v121, %v123
    %v126 = vadd.f32 %v124, %v125
    %v127 = vadd.f32 %v120, %v122
    %v128 = vadd.f32 %v121, %v123
    %v129 = vadd.f32 %v127, %v128
    %v130 = vld [vmem:[#allocation2] sm:$0xff]
    %v131 = vadd.f32 %v130, %v126
    %132 = vst [vmem:[#allocation2] sm:$0xff] %v131
    %v133 = vld [vmem:[#allocation3] sm:$0xff]
    %v134 = vadd.f32 %v133, %v129
    %135 = vst [vmem:[#allocation3] sm:$0xff] %v134
  $region21: #{dice_loss.1} parent=0 // pred_fallthru
    _
  // Predicated region
  $region22: #{dice_loss.1} parent=0 // pred_check
    %p136 = pneg %p75
  $region23: #{dice_loss.1} parent=0 // pred_check_branch
    %138 = sbr.rel (%p136) target = $region25
  $region24: #{dice_loss.1} parent=0 // pred_region
    %v139 = vld [vmem:[#allocation2] sm:$0xff]
    %140 = vst [vmem:[%s2] sm:$0xff] %v139
    %v141 = vld [vmem:[#allocation3] sm:$0xff]
    %s142 = scalar_lea.vmem %s2, 8
    %143 = vst [vmem:[%s142] sm:$0xff] %v141
  $region25: #{dice_loss.1} parent=0 // pred_fallthru
    _
  // Predicated region
  $region26: #{dice_loss.1} parent=0 // pred_check
    _
  $region27: #{dice_loss.1} parent=0 // pred_check_branch
    %145 = sbr.rel (0) target = $region29
  $region28: #{dice_loss.1} parent=0 // pred_region
    _
  $region29: #{dice_loss.1} parent=0 // pred_fallthru
    _
  // Predicated region
  $region30: #{dice_loss.1} parent=0 // pred_check
    _
  $region31: #{dice_loss.1} parent=0 // pred_check_branch
    %147 = sbr.rel (0) target = $region33
  $region32: #{dice_loss.1} parent=0 // pred_region
    _
  $region33: #{dice_loss.1} parent=0 // pred_fallthru
    _

</llo_original>
